<compile_context>
chip_gen: v7x
topology: tpu7x:2x2x1
jax: 0.10.0
libtpu: 0.0.40
codegen_flags: <defaults>
</compile_context>

<pallas_src>
import functools

import jax
import jax.numpy as jnp
import numpy as np
from jax.experimental import pallas as pl
from jax.experimental.pallas import tpu as pltpu

HIDDEN = 150   # hard-coded by `view(-1, 1, 150)` in the reference module
MARGIN = 1.0
LANE = 128
SUBLANE = 8


def _round_up(x, m):
    return (x + m - 1) // m * m


def transe_tile_kernel(ph_ref, pr_ref, pt_ref, nh_ref, nr_ref, nt_ref,
                       out_ref, *, batch, tile_b):
    """One batch tile: (tile_b, Dp) slabs -> one partial hinge-loss sum."""
    t = pl.program_id(0)

    # Per-row scores: sum_d |h + r - t|  (padded lanes are zero -> contribute 0)
    p = jnp.sum(jnp.abs(ph_ref[...] + pr_ref[...] - pt_ref[...]),
                axis=-1, keepdims=True)                      # (tile_b, 1)
    n = jnp.sum(jnp.abs(nh_ref[...] + nr_ref[...] - nt_ref[...]),
                axis=-1, keepdims=True)                      # (tile_b, 1)

    # MarginRankingLoss with y = -1, reduction = sum:
    #   max(0, -y*(pos - neg) + margin) = max(0, pos - neg + margin)
    hinge = jnp.maximum(p - n + MARGIN, 0.0)                 # (tile_b, 1)

    # Zero out batch-padding rows (they would otherwise contribute margin).
    row = t * tile_b + jax.lax.broadcasted_iota(jnp.int32, (tile_b, 1), 0)
    hinge = jnp.where(row < batch, hinge, 0.0)

    partial = jnp.sum(hinge)
    # Lane/sublane-dense unmasked store of the per-tile partial sum.
    out_ref[...] = jnp.full(out_ref.shape, partial, dtype=out_ref.dtype)


def transe_loss(pos_h, pos_r, pos_t, neg_h, neg_r, neg_t,
                ent_emb, rel_emb, *, tile_b=256):
    B = pos_h.shape[0]
    D = ent_emb.shape[1]

    # Pre-gather embedding rows (XLA gather in the wrapper); the kernel then
    # streams pre-gathered (B, D) arrays at HBM-roofline rate.
    ph = jnp.take(ent_emb, pos_h, axis=0)
    pr = jnp.take(rel_emb, pos_r, axis=0)
    pt = jnp.take(ent_emb, pos_t, axis=0)
    nh = jnp.take(ent_emb, neg_h, axis=0)
    nr = jnp.take(rel_emb, neg_r, axis=0)
    nt = jnp.take(ent_emb, neg_t, axis=0)

    # Lane-pad hidden (150 -> 256) and batch-pad so blocks are (8,128)-aligned.
    Dp = _round_up(D, LANE)
    tb = max(SUBLANE, min(tile_b, _round_up(B, SUBLANE)))
    Bp = _round_up(B, tb)
    num_tiles = Bp // tb

    def pad(x):
        return jnp.pad(x, ((0, Bp - B), (0, Dp - D)))

    args = [pad(x) for x in (ph, pr, pt, nh, nr, nt)]

    in_spec = pl.BlockSpec((tb, Dp), lambda i: (i, 0))
    out_spec = pl.BlockSpec((1, SUBLANE, LANE), lambda i: (i, 0, 0))

    partials = pl.pallas_call(
        functools.partial(transe_tile_kernel, batch=B, tile_b=tb),
        out_shape=jax.ShapeDtypeStruct((num_tiles, SUBLANE, LANE), jnp.float32),
        grid_spec=pltpu.PrefetchScalarGridSpec(
            num_scalar_prefetch=0,
            grid=(num_tiles,),
            in_specs=[in_spec] * 6,
            out_specs=out_spec,
        ),
        compiler_params=pltpu.CompilerParams(
            dimension_semantics=("parallel",)),
    )(*args)

    return jnp.sum(partials[:, 0, 0])


def xavier_uniform(key, shape, dtype=jnp.float32):
    fan_in, fan_out = shape[0], shape[1]
    bound = np.sqrt(6.0 / (fan_in + fan_out))
    return jax.random.uniform(key, shape, dtype, minval=-bound, maxval=bound)


def reference_loss(pos_h, pos_r, pos_t, neg_h, neg_r, neg_t, ent_emb, rel_emb):
    ph = ent_emb[pos_h]; pr = rel_emb[pos_r]; pt = ent_emb[pos_t]
    nh = ent_emb[neg_h]; nr = rel_emb[neg_r]; nt = ent_emb[neg_t]
    pos = jnp.sum(jnp.abs(ph + pr - pt), axis=1)
    neg = jnp.sum(jnp.abs(nh + nr - nt), axis=1)
    return jnp.sum(jnp.maximum(pos - neg + MARGIN, 0.0))


if __name__ == "__main__":
    entity_nums = 32
    relation_nums = 8
    batch = 8

    key = jax.random.PRNGKey(0)
    k_ent, k_rel, k_ph, k_pr, k_pt, k_nh, k_nr, k_nt = jax.random.split(key, 8)

    ent_emb = xavier_uniform(k_ent, (entity_nums, HIDDEN))
    rel_emb = xavier_uniform(k_rel, (relation_nums, HIDDEN))
    # TODO(synk): the original F.normalize(...) calls are not in-place -> no-ops; omitted.

    pos_h = jax.random.randint(k_ph, (batch,), 0, entity_nums, dtype=jnp.int32)
    pos_r = jax.random.randint(k_pr, (batch,), 0, relation_nums, dtype=jnp.int32)
    pos_t = jax.random.randint(k_pt, (batch,), 0, entity_nums, dtype=jnp.int32)
    neg_h = jax.random.randint(k_nh, (batch,), 0, entity_nums, dtype=jnp.int32)
    neg_r = jax.random.randint(k_nr, (batch,), 0, relation_nums, dtype=jnp.int32)
    neg_t = jax.random.randint(k_nt, (batch,), 0, entity_nums, dtype=jnp.int32)

    loss = jax.block_until_ready(
        transe_loss(pos_h, pos_r, pos_t, neg_h, neg_r, neg_t, ent_emb, rel_emb))

    ref = jax.block_until_ready(
        reference_loss(pos_h, pos_r, pos_t, neg_h, neg_r, neg_t, ent_emb, rel_emb))

    np.testing.assert_allclose(np.asarray(loss), np.asarray(ref), rtol=1e-5, atol=1e-5)
    print("KERNEL_OK")
</pallas_src>

<mosaic_0001>
module attributes {stable_mosaic.version = 11 : i64} {
  func.func @transe_tile_kernel(%arg0: i32, %arg1: memref<8x256xf32, #tpu.memory_space<vmem>>, %arg2: memref<8x256xf32, #tpu.memory_space<vmem>>, %arg3: memref<8x256xf32, #tpu.memory_space<vmem>>, %arg4: memref<8x256xf32, #tpu.memory_space<vmem>>, %arg5: memref<8x256xf32, #tpu.memory_space<vmem>>, %arg6: memref<8x256xf32, #tpu.memory_space<vmem>>, %arg7: memref<1x8x128xf32, #tpu.memory_space<vmem>>) attributes {dimension_semantics = [#tpu.dimension_semantics<parallel>], iteration_bounds = array<i64: 1>, scalar_prefetch = 0 : i64, scratch_operands = 0 : i64, tpu.core_type = #tpu.core_type<tc>, window_params = [{transform_indices = @transform_0, window_bounds = array<i64: 8, 256>}, {transform_indices = @transform_1, window_bounds = array<i64: 8, 256>}, {transform_indices = @transform_2, window_bounds = array<i64: 8, 256>}, {transform_indices = @transform_3, window_bounds = array<i64: 8, 256>}, {transform_indices = @transform_4, window_bounds = array<i64: 8, 256>}, {transform_indices = @transform_5, window_bounds = array<i64: 8, 256>}, {transform_indices = @transform_6, window_bounds = array<i64: 1, 8, 128>}]} {
    %c0 = arith.constant 0 : index
    %c0_0 = arith.constant 0 : index
    %0 = vector.load %arg1[%c0, %c0_0] : memref<8x256xf32, #tpu.memory_space<vmem>>, vector<8x256xf32>
    %c0_1 = arith.constant 0 : index
    %c0_2 = arith.constant 0 : index
    %1 = vector.load %arg2[%c0_1, %c0_2] : memref<8x256xf32, #tpu.memory_space<vmem>>, vector<8x256xf32>
    %2 = arith.addf %0, %1 : vector<8x256xf32>
    %c0_3 = arith.constant 0 : index
    %c0_4 = arith.constant 0 : index
    %3 = vector.load %arg3[%c0_3, %c0_4] : memref<8x256xf32, #tpu.memory_space<vmem>>, vector<8x256xf32>
    %4 = arith.subf %2, %3 : vector<8x256xf32>
    %5 = math.absf %4 : vector<8x256xf32>
    %cst = arith.constant dense<0.000000e+00> : vector<8xf32>
    %6 = vector.multi_reduction <add>, %5, %cst [1] : vector<8x256xf32> to vector<8xf32>
    %7 = vector.shape_cast %6 : vector<8xf32> to vector<8x1xf32>
    %c0_5 = arith.constant 0 : index
    %c0_6 = arith.constant 0 : index
    %8 = vector.load %arg4[%c0_5, %c0_6] : memref<8x256xf32, #tpu.memory_space<vmem>>, vector<8x256xf32>
    %c0_7 = arith.constant 0 : index
    %c0_8 = arith.constant 0 : index
    %9 = vector.load %arg5[%c0_7, %c0_8] : memref<8x256xf32, #tpu.memory_space<vmem>>, vector<8x256xf32>
    %10 = arith.addf %8, %9 : vector<8x256xf32>
    %c0_9 = arith.constant 0 : index
    %c0_10 = arith.constant 0 : index
    %11 = vector.load %arg6[%c0_9, %c0_10] : memref<8x256xf32, #tpu.memory_space<vmem>>, vector<8x256xf32>
    %12 = arith.subf %10, %11 : vector<8x256xf32>
    %13 = math.absf %12 : vector<8x256xf32>
    %cst_11 = arith.constant dense<0.000000e+00> : vector<8xf32>
    %14 = vector.multi_reduction <add>, %13, %cst_11 [1] : vector<8x256xf32> to vector<8xf32>
    %15 = vector.shape_cast %14 : vector<8xf32> to vector<8x1xf32>
    %16 = arith.subf %7, %15 : vector<8x1xf32>
    %cst_12 = arith.constant 1.000000e+00 : f32
    %17 = vector.broadcast %cst_12 : f32 to vector<8x1xf32>
    %18 = arith.addf %16, %17 : vector<8x1xf32>
    %cst_13 = arith.constant 0.000000e+00 : f32
    %19 = vector.broadcast %cst_13 : f32 to vector<8x1xf32>
    %20 = arith.maximumf %18, %19 : vector<8x1xf32>
    %c8_i32 = arith.constant 8 : i32
    %21 = arith.muli %arg0, %c8_i32 : i32
    %22 = tpu.iota {dimensions = array<i32: 0>} : vector<8x1xi32>
    %23 = vector.broadcast %21 : i32 to vector<8x1xi32>
    %24 = arith.addi %23, %22 : vector<8x1xi32>
    %c8_i32_14 = arith.constant 8 : i32
    %25 = vector.broadcast %c8_i32_14 : i32 to vector<8x1xi32>
    %26 = arith.cmpi slt, %24, %25 : vector<8x1xi32>
    %cst_15 = arith.constant 0.000000e+00 : f32
    %27 = vector.broadcast %cst_15 : f32 to vector<8x1xf32>
    %28 = arith.select %26, %20, %27 : vector<8x1xi1>, vector<8x1xf32>
    %29 = vector.shape_cast %28 : vector<8x1xf32> to vector<1x8x1xf32>
    %cst_16 = arith.constant dense<0.000000e+00> : vector<1xf32>
    %30 = vector.multi_reduction <add>, %29, %cst_16 [1, 2] : vector<1x8x1xf32> to vector<1xf32>
    %31 = vector.shape_cast %30 : vector<1xf32> to vector<1x1x1xf32>
    %32 = vector.extract %31[0, 0, 0] : f32 from vector<1x1x1xf32>
    %33 = vector.broadcast %32 : f32 to vector<1x8x128xf32>
    %c0_17 = arith.constant 0 : index
    %c0_18 = arith.constant 0 : index
    %c0_19 = arith.constant 0 : index
    %34 = vector.load %arg7[%c0_17, %c0_18, %c0_19] : memref<1x8x128xf32, #tpu.memory_space<vmem>>, vector<1x8x128xf32>
    tpu.vector_store %arg7[%c0_17, %c0_18, %c0_19], %33 {strides = array<i32>} : memref<1x8x128xf32, #tpu.memory_space<vmem>>, vector<1x8x128xf32>,
    return
  }
  func.func @transform_0(%arg0: i32) -> (i32, i32) {
    %c0_i32 = arith.constant 0 : i32
    %c0_i32_0 = arith.constant 0 : i32
    return %arg0, %c0_i32 : i32, i32
  }
  func.func @transform_1(%arg0: i32) -> (i32, i32) {
    %c0_i32 = arith.constant 0 : i32
    %c0_i32_0 = arith.constant 0 : i32
    return %arg0, %c0_i32 : i32, i32
  }
  func.func @transform_2(%arg0: i32) -> (i32, i32) {
    %c0_i32 = arith.constant 0 : i32
    %c0_i32_0 = arith.constant 0 : i32
    return %arg0, %c0_i32 : i32, i32
  }
  func.func @transform_3(%arg0: i32) -> (i32, i32) {
    %c0_i32 = arith.constant 0 : i32
    %c0_i32_0 = arith.constant 0 : i32
    return %arg0, %c0_i32 : i32, i32
  }
  func.func @transform_4(%arg0: i32) -> (i32, i32) {
    %c0_i32 = arith.constant 0 : i32
    %c0_i32_0 = arith.constant 0 : i32
    return %arg0, %c0_i32 : i32, i32
  }
  func.func @transform_5(%arg0: i32) -> (i32, i32) {
    %c0_i32 = arith.constant 0 : i32
    %c0_i32_0 = arith.constant 0 : i32
    return %arg0, %c0_i32 : i32, i32
  }
  func.func @transform_6(%arg0: i32) -> (i32, i32, i32) {
    %c0_i32 = arith.constant 0 : i32
    %c0_i32_0 = arith.constant 0 : i32
    %c0_i32_1 = arith.constant 0 : i32
    return %arg0, %c0_i32, %c0_i32_0 : i32, i32, i32
  }
}

</mosaic_0001>

<llo_original>
// kernel: tpu_custom_call.1
$region0: #{tpu_custom_call.1}
  #allocation0 [shape = 'u32[]', space=smem, size = 0x4, offset = 0x4, fixed_abs, tag = 'smem constant byte address 0x4 - core index']
  #allocation1 [shape = 'u32[144,128]{1,0:T(1,128)}', space=vmem, size = 0x12000, scoped, tag = 'internal scratch']
  %s0 = inlined_call_operand.hbm [shape: f32[8,256], index: 0, kind: input, shape index: {}]
  %s1 = inlined_call_operand.hbm [shape: f32[8,256], index: 1, kind: input, shape index: {}]
  %s2 = inlined_call_operand.hbm [shape: f32[8,256], index: 2, kind: input, shape index: {}]
  %s3 = inlined_call_operand.hbm [shape: f32[8,256], index: 3, kind: input, shape index: {}]
  %s4 = inlined_call_operand.hbm [shape: f32[8,256], index: 4, kind: input, shape index: {}]
  %s5 = inlined_call_operand.vmem [shape: f32[8,256], index: 5, kind: input, shape index: {}]
  %s6 = inlined_call_operand.hbm [shape: f32[1,8,128], index: 6, kind: output, shape index: {}]
  %s7 = sld [smem:[#allocation0]]
  $region54: #{tpu_custom_call.1} parent=0
    _
  %s9 = ssub.s32 1, %s7
  %s10 = scalar_select 0, %s9, %s7
  $region1: #{tpu_custom_call.1} parent=0
    #allocation2 [shape = 'u8[8192]{0}', space=vmem, size = 0x2000, scoped, tag = 'input window, operand 0, single buffered']
    #allocation3 [shape = 's32[1]{0}', space=sflag, size = 0x4, scoped, tag = 'scoped memory for tpu_custom_call.1']
    #allocation4 [shape = 's32[1]{0}', space=sflag, size = 0x4, scoped, tag = 'scoped memory for tpu_custom_call.1']
    #allocation5 [shape = 'u8[8192]{0}', space=vmem, size = 0x2000, scoped, tag = 'input window, operand 1, single buffered']
    #allocation6 [shape = 's32[1]{0}', space=sflag, size = 0x4, scoped, tag = 'scoped memory for tpu_custom_call.1']
    #allocation7 [shape = 'u8[8192]{0}', space=vmem, size = 0x2000, scoped, tag = 'input window, operand 2, single buffered']
    #allocation8 [shape = 'u8[8192]{0}', space=vmem, size = 0x2000, scoped, tag = 'input window, operand 3, single buffered']
    #allocation9 [shape = 's32[1]{0}', space=sflag, size = 0x4, scoped, tag = 'scoped memory for tpu_custom_call.1']
    #allocation10 [shape = 'u8[8192]{0}', space=vmem, size = 0x2000, scoped, tag = 'input window, operand 4, single buffered']
    #allocation11 [shape = 'u8[4096]{0}', space=vmem, size = 0x1000, scoped, tag = 'output window, operand 0, single buffered']
    %11 = vsyncpa [#allocation3], 0
    %12 = vsyncpa [#allocation6], 0
    %13 = vsyncpa [#allocation9], 0
    %14 = vsyncpa [#allocation4], 0
    // Predicated region
    $region2: #{tpu_custom_call.1} parent=1 // pred_check
      _
    $region3: #{tpu_custom_call.1} parent=1 // pred_check_branch
      %16 = sbr.rel (0) target = $region5
    $region4: #{tpu_custom_call.1} parent=1 // pred_region
      %s18 = ssub.s32 256, 256
      %19 = vsyncadd [#allocation3], %s18
      %s21 = sshll.u32 [#allocation2], 4
      %s22 = int_to_ptr.vmem [resolvable:$true] %s21
      %24 = dma.hbm_to_vmem [thread:$0]  %s0, 256, %s22, [#allocation3]
    $region5: #{tpu_custom_call.1} parent=1 // pred_fallthru
      _
    // Predicated region
    $region6: #{tpu_custom_call.1} parent=1 // pred_check
      _
    $region7: #{tpu_custom_call.1} parent=1 // pred_check_branch
      %26 = sbr.rel (0) target = $region9
    $region8: #{tpu_custom_call.1} parent=1 // pred_region
      %s28 = ssub.s32 256, 256
      %29 = vsyncadd [#allocation6], %s28
      %s31 = sshll.u32 [#allocation5], 4
      %s32 = int_to_ptr.vmem [resolvable:$true] %s31
      %34 = dma.hbm_to_vmem [thread:$0]  %s1, 256, %s32, [#allocation6]
    $region9: #{tpu_custom_call.1} parent=1 // pred_fallthru
      _
    // Predicated region
    $region10: #{tpu_custom_call.1} parent=1 // pred_check
      _
    $region11: #{tpu_custom_call.1} parent=1 // pred_check_branch
      %36 = sbr.rel (0) target = $region13
    $region12: #{tpu_custom_call.1} parent=1 // pred_region
      %s38 = ssub.s32 256, 256
      %39 = vsyncadd [#allocation6], %s38
      %s41 = sshll.u32 [#allocation7], 4
      %s42 = int_to_ptr.vmem [resolvable:$true] %s41
      %44 = dma.hbm_to_vmem [thread:$0]  %s2, 256, %s42, [#allocation6]
    $region13: #{tpu_custom_call.1} parent=1 // pred_fallthru
      _
    // Predicated region
    $region14: #{tpu_custom_call.1} parent=1 // pred_check
      _
    $region15: #{tpu_custom_call.1} parent=1 // pred_check_branch
      %46 = sbr.rel (0) target = $region17
    $region16: #{tpu_custom_call.1} parent=1 // pred_region
      %s48 = ssub.s32 256, 256
      %49 = vsyncadd [#allocation9], %s48
      %s51 = sshll.u32 [#allocation8], 4
      %s52 = int_to_ptr.vmem [resolvable:$true] %s51
      %54 = dma.hbm_to_vmem [thread:$0]  %s3, 256, %s52, [#allocation9]
    $region17: #{tpu_custom_call.1} parent=1 // pred_fallthru
      _
    // Predicated region
    $region18: #{tpu_custom_call.1} parent=1 // pred_check
      _
    $region19: #{tpu_custom_call.1} parent=1 // pred_check_branch
      %56 = sbr.rel (0) target = $region21
    $region20: #{tpu_custom_call.1} parent=1 // pred_region
      %s58 = ssub.s32 256, 256
      %59 = vsyncadd [#allocation9], %s58
      %s61 = sshll.u32 [#allocation10], 4
      %s62 = int_to_ptr.vmem [resolvable:$true] %s61
      %64 = dma.hbm_to_vmem [thread:$0]  %s4, 256, %s62, [#allocation9]
    $region21: #{tpu_custom_call.1} parent=1 // pred_fallthru
      _
    // Predicated region
    $region22: #{tpu_custom_call.1} parent=1 // pred_check
      _
    $region23: #{tpu_custom_call.1} parent=1 // pred_check_branch
      %66 = sbr.rel (0) target = $region25
    $region24: #{tpu_custom_call.1} parent=1 // pred_region
      _
    $region25: #{tpu_custom_call.1} parent=1 // pred_fallthru
      _
    // Predicated region
    $region26: #{tpu_custom_call.1} parent=1 // pred_check
      _
    $region27: #{tpu_custom_call.1} parent=1 // pred_check_branch
      %68 = sbr.rel (0) target = $region29
    $region28: #{tpu_custom_call.1} parent=1 // pred_region
      %69 = dma.done [#allocation3], 256
    $region29: #{tpu_custom_call.1} parent=1 // pred_fallthru
      _
    // Predicated region
    $region30: #{tpu_custom_call.1} parent=1 // pred_check
      _
    $region31: #{tpu_custom_call.1} parent=1 // pred_check_branch
      %71 = sbr.rel (0) target = $region33
    $region32: #{tpu_custom_call.1} parent=1 // pred_region
      %72 = dma.done [#allocation6], 256
    $region33: #{tpu_custom_call.1} parent=1 // pred_fallthru
      _
    // Predicated region
    $region34: #{tpu_custom_call.1} parent=1 // pred_check
      _
    $region35: #{tpu_custom_call.1} parent=1 // pred_check_branch
      %74 = sbr.rel (0) target = $region37
    $region36: #{tpu_custom_call.1} parent=1 // pred_region
      %75 = dma.done [#allocation6], 256
    $region37: #{tpu_custom_call.1} parent=1 // pred_fallthru
      _
    // Predicated region
    $region38: #{tpu_custom_call.1} parent=1 // pred_check
      _
    $region39: #{tpu_custom_call.1} parent=1 // pred_check_branch
      %77 = sbr.rel (0) target = $region41
    $region40: #{tpu_custom_call.1} parent=1 // pred_region
      %78 = dma.done [#allocation9], 256
    $region41: #{tpu_custom_call.1} parent=1 // pred_fallthru
      _
    // Predicated region
    $region42: #{tpu_custom_call.1} parent=1 // pred_check
      _
    $region43: #{tpu_custom_call.1} parent=1 // pred_check_branch
      %80 = sbr.rel (0) target = $region45
    $region44: #{tpu_custom_call.1} parent=1 // pred_region
      %81 = dma.done [#allocation9], 256
    $region45: #{tpu_custom_call.1} parent=1 // pred_fallthru
      _
    %v82 = vld [vmem:[#allocation2] sm:$0xff]
    %v83 = vld [vmem:[#allocation2 + $0x8] sm:$0xff]
    %v84 = vld [vmem:[#allocation5] sm:$0xff]
    %v85 = vld [vmem:[#allocation5 + $0x8] sm:$0xff]
    %v86 = vadd.f32 %v82, %v84
    %v87 = vadd.f32 %v83, %v85
    %v88 = vld [vmem:[#allocation7] sm:$0xff]
    %v89 = vld [vmem:[#allocation7 + $0x8] sm:$0xff]
    %v90 = vsub.f32 %v86, %v88
    %v91 = vsub.f32 %v87, %v89
    %v92 = vand.u32 2147483647, %v90
    %v93 = vand.u32 2147483647, %v91
    %v94 = vadd.f32 %v92, %v93
    %95 = vadd.xlane.f32.xlu0 %v94
    %v96 = vpop.xlane.xlu0 %95
    %v97 = vld [vmem:[#allocation8] sm:$0xff]
    %v98 = vld [vmem:[#allocation8 + $0x8] sm:$0xff]
    %v99 = vld [vmem:[#allocation10] sm:$0xff]
    %v100 = vld [vmem:[#allocation10 + $0x8] sm:$0xff]
    %v101 = vadd.f32 %v97, %v99
    %v102 = vadd.f32 %v98, %v100
    %v103 = vld [vmem:[%s5] sm:$0xff]
    %v104 = vld [vmem:[%s5 + $0x8] sm:$0xff]
    %v105 = vsub.f32 %v101, %v103
    %v106 = vsub.f32 %v102, %v104
    %v107 = vand.u32 2147483647, %v105
    %v108 = vand.u32 2147483647, %v106
    %v109 = vadd.f32 %v107, %v108
    %110 = vadd.xlane.f32.xlu0 %v109
    %v111 = vpop.xlane.xlu0 %110
    %v112 = vsub.f32 %v96, %v111
    %v113 = vadd.f32 %v112, 1.0
    %v114 = vmax.f32 %v113, 0.0
    %s115 = smul.u32 0, 8
    %v116 = vlaneseq
    %v117 = vshrl.u32 %v116, 7
    %v118 = vstv %s115
    %v119 = vadd.s32 %v118, %v117
    %vm120 = vcmp.lt.s32.totalorder %v119, 8
    %v121 = vsel %vm120, %v114, 0.0
    %vm122 = vcmask 7168
    %v123 = vsel %vm122, %v121, 0.0
    %124 = vadd.xlane.f32.xlu0 %v123
    %v125 = vpop.xlane.xlu0 %124
    %v126 = vrot.slane %v125, 4
    %v127 = vadd.f32 %v125, %v126
    %v128 = vrot.slane %v127, 2
    %v129 = vadd.f32 %v127, %v128
    %v130 = vrot.slane %v129, 1
    %v131 = vadd.f32 %v129, %v130
    %s132 = vtos %v131
    %v133 = vstv %s132
    %134 = vst [vmem:[#allocation11] sm:$0xff] %v133
    // Predicated region
    $region46: #{tpu_custom_call.1} parent=1 // pred_check
      _
    $region47: #{tpu_custom_call.1} parent=1 // pred_check_branch
      %136 = sbr.rel (0) target = $region49
    $region48: #{tpu_custom_call.1} parent=1 // pred_region
      %s138 = ssub.s32 128, 128
      %139 = vsyncadd [#allocation4], %s138
      %s141 = sshll.u32 [#allocation11], 4
      %s142 = int_to_ptr.vmem [resolvable:$true] %s141
      %144 = dma.vmem_to_hbm [thread:$0]  %s142, 128, %s6, [#allocation4]
    $region49: #{tpu_custom_call.1} parent=1 // pred_fallthru
      _
    // Predicated region
    $region50: #{tpu_custom_call.1} parent=1 // pred_check
      _
    $region51: #{tpu_custom_call.1} parent=1 // pred_check_branch
      %146 = sbr.rel (0) target = $region53
    $region52: #{tpu_custom_call.1} parent=1 // pred_region
      %147 = dma.done [#allocation4], 128
    $region53: #{tpu_custom_call.1} parent=1 // pred_fallthru
      _
    %148 = vsyncpa [#allocation3], 1
    %149 = vsyncpa [#allocation6], 1
    %150 = vsyncpa [#allocation9], 1
    %151 = vsyncpa [#allocation4], 1

</llo_original>
